<compile_context>
chip_gen: v7x
topology: tpu7x:2x2x1
jax: 0.10.0
libtpu: 0.0.40
codegen_flags: <defaults>
</compile_context>

<pallas_src>
import functools

import jax
import jax.numpy as jnp
from jax.experimental import pallas as pl
from jax.experimental.pallas import tpu as pltpu

# Constants from the PyTorch source.
GRID_SIZE = 100
XE, XS = 0.5, -0.5
LX = XE - XS
DX = LX / GRID_SIZE          # dx = lx / grid_size = 0.01


def _centdif_roll_kernel(um_ref, out_ref, *, c1, c2, c3):
    """Lane-aligned path (L % 128 == 0): periodic shifts via XLU lane rotations."""
    u = um_ref[...].astype(jnp.float32)          # (TR, L)
    L = u.shape[-1]
    ul1 = pltpu.roll(u, 1, axis=1)               # u[:, i-1]
    ul2 = pltpu.roll(u, 2, axis=1)               # u[:, i-2]
    ul3 = pltpu.roll(u, 3, axis=1)               # u[:, i-3]
    ur1 = pltpu.roll(u, L - 1, axis=1)           # u[:, i+1]  (non-negative shift)
    ur2 = pltpu.roll(u, L - 2, axis=1)           # u[:, i+2]
    ur3 = pltpu.roll(u, L - 3, axis=1)           # u[:, i+3]
    out = u * (c1 * (ur1 - ul1) + c2 * (ul2 - ur2) + c3 * (ur3 - ul3))
    out_ref[...] = out.astype(out_ref.dtype)


def _centdif_halo_kernel(up_ref, out_ref, *, L, c1, c2, c3):
    """General-L path: input carries a 3-cell periodic halo; shifts are static slices."""
    up = up_ref[...].astype(jnp.float32)         # (TR, L+6) = [u[:, -3:], u, u[:, :3]]
    u = up[:, 3:3 + L]
    ul1 = up[:, 2:2 + L]
    ul2 = up[:, 1:1 + L]
    ul3 = up[:, 0:L]
    ur1 = up[:, 4:4 + L]
    ur2 = up[:, 5:5 + L]
    ur3 = up[:, 6:6 + L]
    out = u * (c1 * (ur1 - ul1) + c2 * (ul2 - ur2) + c3 * (ur3 - ul3))
    out_ref[...] = out.astype(out_ref.dtype)


def centdif_forward(um, dx=DX, *, max_rows_per_tile=2048, donate_input=False):
    """Pallas equivalent of CentDif(dx).forward(um) for um of shape (M, C, L)."""
    M, C, L = um.shape
    R = M * C
    u2 = um.reshape(R, L)                        # free: merge leading dims, L on lanes

    inv_60dx = 1.0 / (60.0 * float(dx))
    c1, c2, c3 = -45.0 * inv_60dx, -9.0 * inv_60dx, -1.0 * inv_60dx

    # Row tile: full R for small inputs (block dim == array dim is always legal);
    # otherwise a sublane-aligned tile of <= max_rows_per_tile rows.
    if R <= max_rows_per_tile:
        tr = R
    else:
        tr = max(8, (max_rows_per_tile // 8) * 8)
    grid = (pl.cdiv(R, tr),)
    cparams = pltpu.CompilerParams(dimension_semantics=("parallel",))

    if L % 128 == 0:
        kernel = functools.partial(_centdif_roll_kernel, c1=c1, c2=c2, c3=c3)
        out2 = pl.pallas_call(
            kernel,
            out_shape=jax.ShapeDtypeStruct((R, L), um.dtype),
            grid=grid,
            in_specs=[pl.BlockSpec((tr, L), lambda i: (i, 0))],
            out_specs=pl.BlockSpec((tr, L), lambda i: (i, 0)),
            input_output_aliases={0: 0} if donate_input else {},
            compiler_params=cparams,
        )(u2)
    else:
        # Non-lane-aligned L (e.g. the module's grid_size=100): build a 3-cell periodic
        # halo in the wrapper so the wrap never touches lane padding, then use static
        # slices in-kernel. Costs 6 extra lanes/row of HBM traffic (~6% at L=100).
        up = jnp.concatenate([u2[:, -3:], u2, u2[:, :3]], axis=1)   # (R, L+6)
        kernel = functools.partial(_centdif_halo_kernel, L=L, c1=c1, c2=c2, c3=c3)
        out2 = pl.pallas_call(
            kernel,
            out_shape=jax.ShapeDtypeStruct((R, L), um.dtype),
            grid=grid,
            in_specs=[pl.BlockSpec((tr, L + 6), lambda i: (i, 0))],
            out_specs=pl.BlockSpec((tr, L), lambda i: (i, 0)),
            compiler_params=cparams,
        )(up)
    return out2.reshape(M, C, L)


# ----------------------------- pure-JAX reference -----------------------------
def _ref_forward(um, dx=DX):
    ul1 = jnp.roll(um, 1, axis=2)
    ur1 = jnp.roll(um, -1, axis=2)
    ul2 = jnp.roll(um, 2, axis=2)
    ur2 = jnp.roll(um, -2, axis=2)
    ul3 = jnp.roll(um, 3, axis=2)
    ur3 = jnp.roll(um, -3, axis=2)
    du = (-ul3 + 9.0 * ul2 - 45.0 * ul1 + 45.0 * ur1 - 9.0 * ur2 + ur3) / (60.0 * dx)
    return -um * du


def _check(out, ref, rtol, atol):
    assert out.shape == ref.shape
    assert bool(jnp.all(jnp.isfinite(out)))
    assert bool(jnp.allclose(out.astype(jnp.float32), ref.astype(jnp.float32),
                             rtol=rtol, atol=atol))


if __name__ == "__main__":
    key = jax.random.PRNGKey(0)
    k1, k2, k3 = jax.random.split(key, 3)

    # 1) Module-faithful shape: L = grid_size = 100 (non-128-multiple -> halo path).
    um100 = jax.random.normal(k1, (2, 4, GRID_SIZE), dtype=jnp.float32)
    out100 = jax.block_until_ready(centdif_forward(um100, DX))
    _check(out100, _ref_forward(um100, DX), rtol=5e-4, atol=5e-3)

    # 2) Lane-aligned L = 128 (XLU-roll path), dx consistent with that resolution.
    dx128 = LX / 128
    um128 = jax.random.normal(k2, (2, 4, 128), dtype=jnp.float32)
    out128 = jax.block_until_ready(centdif_forward(um128, dx128))
    _check(out128, _ref_forward(um128, dx128), rtol=5e-4, atol=5e-3)

    # 3) Row-tiled grid (multiple grid steps) on a small shape: R = 48, TR = 16 -> grid=(3,).
    umt = jax.random.normal(k3, (6, 8, 128), dtype=jnp.float32)
    outt = jax.block_until_ready(centdif_forward(umt, dx128, max_rows_per_tile=16))
    _check(outt, _ref_forward(umt, dx128), rtol=5e-4, atol=5e-3)

    # 3b) Tiled grid on the non-lane-aligned (halo) path as well.
    umth = jax.random.normal(k3, (6, 8, GRID_SIZE), dtype=jnp.float32)
    outth = jax.block_until_ready(centdif_forward(umth, DX, max_rows_per_tile=16))
    _check(outth, _ref_forward(umth, DX), rtol=5e-4, atol=5e-3)

    # 4) bf16 I/O (bandwidth optimization): f32 compute in-kernel, bf16 in/out.
    um_bf = um128.astype(jnp.bfloat16)
    ref_bf = _ref_forward(um_bf.astype(jnp.float32), dx128)
    out_bf = jax.block_until_ready(centdif_forward(um_bf, dx128))
    atol_bf = 0.03 * float(jnp.max(jnp.abs(ref_bf)))
    _check(out_bf, ref_bf, rtol=3e-2, atol=atol_bf)

    print("KERNEL_OK")
</pallas_src>

<mosaic_0001>
module attributes {stable_mosaic.version = 11 : i64} {
  func.func @_centdif_halo_kernel(%arg0: i32, %arg1: memref<8x106xf32, #tpu.memory_space<vmem>>, %arg2: memref<8x100xf32, #tpu.memory_space<vmem>>) attributes {dimension_semantics = [#tpu.dimension_semantics<parallel>], iteration_bounds = array<i64: 1>, scalar_prefetch = 0 : i64, scratch_operands = 0 : i64, tpu.core_type = #tpu.core_type<tc>, window_params = [{transform_indices = @transform_0, window_bounds = array<i64: 8, 106>}, {transform_indices = @transform_1, window_bounds = array<i64: 8, 100>}]} {
    %c0 = arith.constant 0 : index
    %c0_0 = arith.constant 0 : index
    %0 = vector.load %arg1[%c0, %c0_0] : memref<8x106xf32, #tpu.memory_space<vmem>>, vector<8x106xf32>
    %1 = vector.extract_strided_slice %0 {offsets = [0, 3], sizes = [8, 100], strides = [1, 1]} : vector<8x106xf32> to vector<8x100xf32>
    %2 = vector.extract_strided_slice %0 {offsets = [0, 2], sizes = [8, 100], strides = [1, 1]} : vector<8x106xf32> to vector<8x100xf32>
    %3 = vector.extract_strided_slice %0 {offsets = [0, 1], sizes = [8, 100], strides = [1, 1]} : vector<8x106xf32> to vector<8x100xf32>
    %4 = vector.extract_strided_slice %0 {offsets = [0, 0], sizes = [8, 100], strides = [1, 1]} : vector<8x106xf32> to vector<8x100xf32>
    %5 = vector.extract_strided_slice %0 {offsets = [0, 4], sizes = [8, 100], strides = [1, 1]} : vector<8x106xf32> to vector<8x100xf32>
    %6 = vector.extract_strided_slice %0 {offsets = [0, 5], sizes = [8, 100], strides = [1, 1]} : vector<8x106xf32> to vector<8x100xf32>
    %7 = vector.extract_strided_slice %0 {offsets = [0, 6], sizes = [8, 100], strides = [1, 1]} : vector<8x106xf32> to vector<8x100xf32>
    %8 = arith.subf %5, %2 : vector<8x100xf32>
    %cst = arith.constant -7.500000e+01 : f32
    %9 = vector.broadcast %cst : f32 to vector<8x100xf32>
    %10 = arith.mulf %9, %8 : vector<8x100xf32>
    %11 = arith.subf %3, %6 : vector<8x100xf32>
    %cst_1 = arith.constant -1.500000e+01 : f32
    %12 = vector.broadcast %cst_1 : f32 to vector<8x100xf32>
    %13 = arith.mulf %12, %11 : vector<8x100xf32>
    %14 = arith.addf %10, %13 : vector<8x100xf32>
    %15 = arith.subf %7, %4 : vector<8x100xf32>
    %cst_2 = arith.constant -1.66666663 : f32
    %16 = vector.broadcast %cst_2 : f32 to vector<8x100xf32>
    %17 = arith.mulf %16, %15 : vector<8x100xf32>
    %18 = arith.addf %14, %17 : vector<8x100xf32>
    %19 = arith.mulf %1, %18 : vector<8x100xf32>
    %c0_3 = arith.constant 0 : index
    %c0_4 = arith.constant 0 : index
    %20 = vector.load %arg2[%c0_3, %c0_4] : memref<8x100xf32, #tpu.memory_space<vmem>>, vector<8x100xf32>
    tpu.vector_store %arg2[%c0_3, %c0_4], %19 {strides = array<i32>} : memref<8x100xf32, #tpu.memory_space<vmem>>, vector<8x100xf32>,
    return
  }
  func.func @transform_0(%arg0: i32) -> (i32, i32) {
    %c0_i32 = arith.constant 0 : i32
    %c0_i32_0 = arith.constant 0 : i32
    return %arg0, %c0_i32 : i32, i32
  }
  func.func @transform_1(%arg0: i32) -> (i32, i32) {
    %c0_i32 = arith.constant 0 : i32
    %c0_i32_0 = arith.constant 0 : i32
    return %arg0, %c0_i32 : i32, i32
  }
}

</mosaic_0001>

<llo_original>
// kernel: tpu_custom_call.1
$region0: #{tpu_custom_call.1}
  #allocation0 [shape = 'u32[]', space=smem, size = 0x4, offset = 0x4, fixed_abs, tag = 'smem constant byte address 0x4 - core index']
  #allocation1 [shape = 'u32[144,128]{1,0:T(1,128)}', space=vmem, size = 0x12000, scoped, tag = 'internal scratch']
  %s0 = inlined_call_operand.hbm [shape: f32[8,106], index: 0, kind: input, shape index: {}]
  %s1 = inlined_call_operand.hbm [shape: f32[8,100], index: 1, kind: output, shape index: {}]
  %s2 = sld [smem:[#allocation0]]
  $region18: #{tpu_custom_call.1} parent=0
    _
  %s4 = ssub.s32 1, %s2
  %s5 = scalar_select 0, %s4, %s2
  $region1: #{tpu_custom_call.1} parent=0
    #allocation2 [shape = 'u8[4096]{0}', space=vmem, size = 0x1000, scoped, tag = 'input window, operand 0, single buffered']
    #allocation3 [shape = 's32[1]{0}', space=sflag, size = 0x4, scoped, tag = 'scoped memory for tpu_custom_call.1']
    #allocation4 [shape = 's32[1]{0}', space=sflag, size = 0x4, scoped, tag = 'scoped memory for tpu_custom_call.1']
    #allocation5 [shape = 'u8[4096]{0}', space=vmem, size = 0x1000, scoped, tag = 'output window, operand 0, single buffered']
    %6 = vsyncpa [#allocation3], 0
    %7 = vsyncpa [#allocation4], 0
    // Predicated region
    $region2: #{tpu_custom_call.1} parent=1 // pred_check
      _
    $region3: #{tpu_custom_call.1} parent=1 // pred_check_branch
      %9 = sbr.rel (0) target = $region5
    $region4: #{tpu_custom_call.1} parent=1 // pred_region
      %s11 = ssub.s32 128, 128
      %12 = vsyncadd [#allocation3], %s11
      %s14 = sshll.u32 [#allocation2], 4
      %s15 = int_to_ptr.vmem [resolvable:$true] %s14
      %17 = dma.hbm_to_vmem [thread:$0]  %s0, 128, %s15, [#allocation3]
    $region5: #{tpu_custom_call.1} parent=1 // pred_fallthru
      _
    // Predicated region
    $region6: #{tpu_custom_call.1} parent=1 // pred_check
      _
    $region7: #{tpu_custom_call.1} parent=1 // pred_check_branch
      %19 = sbr.rel (0) target = $region9
    $region8: #{tpu_custom_call.1} parent=1 // pred_region
      %20 = dma.done [#allocation3], 128
    $region9: #{tpu_custom_call.1} parent=1 // pred_fallthru
      _
    %v21 = vld [vmem:[#allocation2] sm:$0xff]
    %23 = vrot.lane.b32.xlu0 %v21, 2
    %v24 = vpop.permute.xlu0 %23
    %v26 = vsub.f32 %v21, %v24
    %v27 = vmul.f32 %v26, -75.0
    %28 = vrot.lane.b32.xlu0 %v21, 124
    %v29 = vpop.permute.xlu0 %28
    %v31 = vsub.f32 %v21, %v29
    %v32 = vmul.f32 %v31, -15.0
    %34 = vrot.lane.b32.xlu0 %v32, 3
    %v35 = vpop.permute.xlu0 %34
    %v37 = vadd.f32 %v27, %v35
    %38 = vrot.lane.b32.xlu0 %v21, 6
    %v39 = vpop.permute.xlu0 %38
    %v41 = vsub.f32 %v21, %v39
    %v42 = vmul.f32 %v41, -1.6666666
    %44 = vrot.lane.b32.xlu0 %v42, 126
    %v45 = vpop.permute.xlu0 %44
    %v47 = vadd.f32 %v37, %v45
    %49 = vrot.lane.b32.xlu0 %v47, 127
    %v50 = vpop.permute.xlu0 %49
    %v52 = vmul.f32 %v21, %v50
    %54 = vrot.lane.b32.xlu0 %v52, 125
    %v55 = vpop.permute.xlu0 %54
    %vm57 = vcmask 818176
    %58 = vst.msk [vmem:[#allocation5] sm:$0xff] %vm57, %v55
    // Predicated region
    $region10: #{tpu_custom_call.1} parent=1 // pred_check
      _
    $region11: #{tpu_custom_call.1} parent=1 // pred_check_branch
      %60 = sbr.rel (0) target = $region13
    $region12: #{tpu_custom_call.1} parent=1 // pred_region
      %s62 = ssub.s32 128, 128
      %63 = vsyncadd [#allocation4], %s62
      %s65 = sshll.u32 [#allocation5], 4
      %s66 = int_to_ptr.vmem [resolvable:$true] %s65
      %68 = dma.vmem_to_hbm [thread:$0]  %s66, 128, %s1, [#allocation4]
    $region13: #{tpu_custom_call.1} parent=1 // pred_fallthru
      _
    // Predicated region
    $region14: #{tpu_custom_call.1} parent=1 // pred_check
      _
    $region15: #{tpu_custom_call.1} parent=1 // pred_check_branch
      %70 = sbr.rel (0) target = $region17
    $region16: #{tpu_custom_call.1} parent=1 // pred_region
      %71 = dma.done [#allocation4], 128
    $region17: #{tpu_custom_call.1} parent=1 // pred_fallthru
      _
    %72 = vsyncpa [#allocation3], 1
    %73 = vsyncpa [#allocation4], 1

</llo_original>
